<compile_context>
chip_gen: v7x
topology: tpu7x:2x2x1
jax: 0.10.0
libtpu: 0.0.40
codegen_flags: <defaults>
</compile_context>

<pallas_src>
import jax
import jax.numpy as jnp
from jax.experimental import pallas as pl
from jax.experimental.pallas import tpu as pltpu


def pefusion_kernel(x_ref, cord_ref, o_ref):
    # x_ref:    (Cx, tS)      feature slab of one batch element (lane-dense)
    # cord_ref: (Cc, tS)      precomputed positional-encoding slab (batch-invariant)
    # o_ref:    (Cx+Cc, tS)   concat([x, cord]) along channels
    # Build the full output tile in registers and emit ONE dense store.
    o_ref[...] = jnp.concatenate(
        [x_ref[...].astype(o_ref.dtype), cord_ref[...].astype(o_ref.dtype)],
        axis=0,
    )


def _pad_up(n, m):
    return ((n + m - 1) // m) * m


def _pick_spatial_tile(hw, cx, cc, dtype, budget_bytes=8 << 20):
    """Largest 128-aligned tile of the flattened H*W axis within the VMEM budget.

    Accounts for double buffering, dtype itemsize and sublane padding of the
    small channel dims.  No divisibility requirement on H*W: the grid uses
    cdiv and the ragged last tile is masked by Pallas.
    Returns (tile, estimated_double_buffered_bytes).
    """
    itemsize = jnp.dtype(dtype).itemsize
    sublane = max(8, 32 // max(itemsize, 1))         # 8 f32, 16 bf16, 32 int8
    rows = _pad_up(cx, sublane) + _pad_up(cc, sublane) + _pad_up(cx + cc, sublane)
    per_lane = 2 * rows * itemsize                   # x2 for double buffering
    if hw <= 128:
        return hw, per_lane * _pad_up(hw, 128)       # full-extent block, tiny
    tile = max(128, (budget_bytes // per_lane) // 128 * 128)
    tile = min(tile, _pad_up(hw, 128))
    return tile, per_lane * tile


def pefusion(x, w):
    """x: (B, Cx, H, W);  w: (Cc, 2) 1x1-conv weight -> (B, Cx+Cc, H, W)."""
    B, Cx, H, W = x.shape
    Cc = w.shape[0]
    HW = H * W

    # Batch-invariant positional-encoding plane, computed once outside the
    # kernel.  Exact same arithmetic as the PyTorch forward (divide by h/16).
    yy = jnp.arange(H, dtype=jnp.float32) / (H / 16.0) - 1.0
    xx = jnp.arange(W, dtype=jnp.float32) / (W / 16.0) - 1.0
    coords = jnp.stack(
        [
            jnp.broadcast_to(yy[:, None], (H, W)),
            jnp.broadcast_to(xx[None, :], (H, W)),
        ],
        axis=0,
    )                                                   # (2, H, W)
    cord = jnp.einsum("kc,chw->khw", w, coords)         # 1x1 conv, no bias
    cord = cord.reshape(Cc, HW).astype(x.dtype)

    # Lane-dense flattened layout.
    x_flat = x.reshape(B, Cx, HW)
    tS, vmem_bytes = _pick_spatial_tile(HW, Cx, Cc, x.dtype)
    nS = pl.cdiv(HW, tS)
    vmem_limit = int(min(48 << 20, max(16 << 20, vmem_bytes + (4 << 20))))

    out_flat = pl.pallas_call(
        pefusion_kernel,
        out_shape=jax.ShapeDtypeStruct((B, Cx + Cc, HW), x.dtype),
        # Spatial tiles OUTER, batch INNER: cord's block index is unchanged
        # between consecutive steps, so its DMA is skipped after the first
        # fetch of each spatial tile; nS is the outermost parallel axis for
        # megacore sharding even when B == 1.
        grid=(nS, B),
        in_specs=[
            pl.BlockSpec((None, Cx, tS), lambda s, b: (b, 0, s)),   # batch dim squeezed
            pl.BlockSpec((Cc, tS), lambda s, b: (0, s)),
        ],
        out_specs=pl.BlockSpec((None, Cx + Cc, tS), lambda s, b: (b, 0, s)),
        compiler_params=pltpu.CompilerParams(
            dimension_semantics=("parallel", "parallel"),
            vmem_limit_bytes=vmem_limit,
        ),
    )(x_flat, cord)
    return out_flat.reshape(B, Cx + Cc, H, W)


def pefusion_reference(x, w):
    """Pure-JAX reference mirroring the PyTorch forward."""
    B, _, H, W = x.shape
    yy, xx = jnp.meshgrid(jnp.arange(H), jnp.arange(W), indexing="ij")
    yy = yy.astype(jnp.float32) / (H / 16.0) - 1.0
    xx = xx.astype(jnp.float32) / (W / 16.0) - 1.0
    coords = jnp.stack([yy, xx], axis=0)                     # (2, H, W)
    cord = jnp.einsum("kc,chw->khw", w, coords)              # 1x1 conv, no bias
    cord = jnp.broadcast_to(cord[None], (B,) + cord.shape)   # repeat over batch
    return jnp.concatenate([x, cord], axis=1)


if __name__ == "__main__":
    key = jax.random.PRNGKey(0)
    kx, kw = jax.random.split(key)

    B, Cx, H, W = 2, 4, 16, 16
    channel1 = 8  # mlp = Conv2d(2, channel1, 1, bias=False)

    x = jax.random.normal(kx, (B, Cx, H, W), dtype=jnp.float32)
    # deterministic synthetic conv weight, shape (out_ch=channel1, in_ch=2)
    w = jax.random.normal(kw, (channel1, 2), dtype=jnp.float32) * 0.5

    out = jax.block_until_ready(pefusion(x, w))

    ref = pefusion_reference(x, w)
    assert out.shape == (B, Cx + channel1, H, W), out.shape
    assert jnp.allclose(out, ref, atol=1e-5, rtol=1e-5), "mismatch vs reference"

    print("KERNEL_OK")
</pallas_src>

<mosaic_0001>
module attributes {stable_mosaic.version = 11 : i64} {
  func.func @pefusion_kernel(%arg0: i32, %arg1: i32, %arg2: memref<1x4x256xf32, #tpu.memory_space<vmem>>, %arg3: memref<8x256xf32, #tpu.memory_space<vmem>>, %arg4: memref<1x12x256xf32, #tpu.memory_space<vmem>>) attributes {dimension_semantics = [#tpu.dimension_semantics<parallel>, #tpu.dimension_semantics<parallel>], iteration_bounds = array<i64: 1, 2>, scalar_prefetch = 0 : i64, scratch_operands = 0 : i64, tpu.core_type = #tpu.core_type<tc>, window_params = [{transform_indices = @transform_0, window_bounds = array<i64: 1, 4, 256>}, {transform_indices = @transform_1, window_bounds = array<i64: 8, 256>}, {transform_indices = @transform_2, window_bounds = array<i64: 1, 12, 256>}]} {
    %c0 = arith.constant 0 : index
    %c0_0 = arith.constant 0 : index
    %c0_1 = arith.constant 0 : index
    %0 = vector.load %arg2[%c0, %c0_0, %c0_1] : memref<1x4x256xf32, #tpu.memory_space<vmem>>, vector<1x4x256xf32>
    %1 = vector.shape_cast %0 : vector<1x4x256xf32> to vector<4x256xf32>
    %c0_2 = arith.constant 0 : index
    %c0_3 = arith.constant 0 : index
    %2 = vector.load %arg3[%c0_2, %c0_3] : memref<8x256xf32, #tpu.memory_space<vmem>>, vector<8x256xf32>
    %3 = tpu.concatenate %1, %2 in 0 : vector<4x256xf32>, vector<8x256xf32> -> vector<12x256xf32>
    %c0_4 = arith.constant 0 : index
    %c0_5 = arith.constant 0 : index
    %c0_6 = arith.constant 0 : index
    %4 = vector.load %arg4[%c0_4, %c0_5, %c0_6] : memref<1x12x256xf32, #tpu.memory_space<vmem>>, vector<1x12x256xf32>
    %5 = vector.shape_cast %4 : vector<1x12x256xf32> to vector<12x256xf32>
    %6 = vector.shape_cast %3 : vector<12x256xf32> to vector<1x12x256xf32>
    tpu.vector_store %arg4[%c0_4, %c0_5, %c0_6], %6 {strides = array<i32>} : memref<1x12x256xf32, #tpu.memory_space<vmem>>, vector<1x12x256xf32>,
    return
  }
  func.func @transform_0(%arg0: i32, %arg1: i32) -> (i32, i32, i32) {
    %c0_i32 = arith.constant 0 : i32
    %c0_i32_0 = arith.constant 0 : i32
    return %arg1, %c0_i32, %arg0 : i32, i32, i32
  }
  func.func @transform_1(%arg0: i32, %arg1: i32) -> (i32, i32) {
    %c0_i32 = arith.constant 0 : i32
    %c0_i32_0 = arith.constant 0 : i32
    return %c0_i32, %arg0 : i32, i32
  }
  func.func @transform_2(%arg0: i32, %arg1: i32) -> (i32, i32, i32) {
    %c0_i32 = arith.constant 0 : i32
    %c0_i32_0 = arith.constant 0 : i32
    return %arg1, %c0_i32, %arg0 : i32, i32, i32
  }
}

</mosaic_0001>

<llo_original>
// kernel: tpu_custom_call.1
$region0: #{tpu_custom_call.1}
  #allocation0 [shape = 'u32[]', space=smem, size = 0x4, offset = 0x4, fixed_abs, tag = 'smem constant byte address 0x4 - core index']
  #allocation1 [shape = 'u32[144,128]{1,0:T(1,128)}', space=vmem, size = 0x12000, scoped, tag = 'internal scratch']
  %s0 = inlined_call_operand.hbm [shape: f32[2,4,256], index: 0, kind: input, shape index: {}]
  %s1 = inlined_call_operand.hbm [shape: f32[8,256], index: 1, kind: input, shape index: {}]
  %s2 = inlined_call_operand.vmem [shape: f32[2,12,256], index: 2, kind: output, shape index: {}]
  %s3 = sld [smem:[#allocation0]]
  $region49: #{tpu_custom_call.1} parent=0
    _
  %s5 = ssub.s32 1, %s3
  %s6 = scalar_select 0, %s5, %s3
  $region1: #{tpu_custom_call.1} parent=0
    #allocation2 [shape = 'u8[8192]{0}', space=vmem, size = 0x2000, scoped, tag = 'input window, operand 0']
    #allocation3 [shape = 's32[2]{0}', space=sflag, size = 0x8, scoped, tag = 'scoped memory for tpu_custom_call.1']
    #allocation4 [shape = 'u8[8192]{0}', space=vmem, size = 0x2000, scoped, tag = 'input window, operand 1, single buffered']
    #allocation5 [shape = 's32[1]{0}', space=sflag, size = 0x4, scoped, tag = 'scoped memory for tpu_custom_call.1']
    %7 = vsyncpa [#allocation3], 0
    %s8 = scalar_lea.sflag [#allocation3], 1
    %9 = vsyncpa %s8, 0
    %10 = vsyncpa [#allocation5], 0
    loop: start=0, step=1, limit=4
    $region2: #{tpu_custom_call.1} parent=1 // loop_pre_header
      _
    $region3: #{tpu_custom_call.1} parent=1 // loop_header
      %s12 = sphi 0, %s16
      %p13 = scmp.ge.s32.totalorder %s12, 4
      %s19 = sphi 0, %s31
      %s20 = sphi 0, %s27
      %s21 = sphi 0, %s19
      %s22 = sphi 0, %s20
      %s23 = sphi 0, %s21
      %s24 = sphi 0, %s22
      %s36 = sphi 0, %s38
      %s39 = sphi 0, %s36
      %s40 = sphi 0, %s39
      %s56 = sphi 0, %s40
      %s62 = sphi 0, %s64
      %s65 = sphi 0, %s62
      %s66 = sphi 0, %s65
      %s82 = sphi 0, %s66
      %s90 = sphi 0, %s92
      %s93 = sphi 0, %s90
      %s94 = sphi 0, %s93
      %s110 = sphi 0, %s94
    $region4: #{tpu_custom_call.1} parent=1 // loop_header_branch
      %15 = sbr.rel (%p13) target = $region8
    $region5: #{tpu_custom_call.1} parent=1 // loop_body
      %s17 = ssub.s32 %s12, 1
      %s18 = ssub.s32 %s12, 2
      %s25 = sadd.s32 1, %s20
      %p26 = scmp.ge.s32.totalorder %s25, 2
      %s27 = scalar_select %p26, 0, %s25
      %s28 = sadd.s32 1, %s19
      %s29 = scalar_select %p26, %s28, %s19
      %p30 = scmp.ge.s32.totalorder %s29, 1
      %s31 = scalar_select %p30, 0, %s29
      %s32 = ssub.s32 %s20, %s27
      %s33 = ssub.s32 %s19, %s31
      %s34 = sor.u32 %s32, %s33
      %p35 = scmp.eq.s32.totalorder %s34, 0
      %s37 = sadd.s32 %s36, 1
      %s38 = scalar_select %p35, %s36, %s37
      %p41 = pneg %p35
      %p42 = scmp.eq.s32.totalorder %s12, 1
      %p43 = por %p41, %p42
      %p44 = scmp.ne.s32.totalorder %s36, %s39
      %p45 = scmp.eq.s32.totalorder %s12, 0
      %p46 = por %p44, %p45
      %p47 = scmp.ne.s32.totalorder %s36, %s39
      %p48 = scmp.eq.s32.totalorder %s17, 1
      %p49 = por %p47, %p48
      %p50 = scmp.ne.s32.totalorder %s39, %s40
      %p51 = scmp.eq.s32.totalorder %s17, 0
      %p52 = por %p50, %p51
      %p53 = scmp.ne.s32.totalorder %s39, %s40
      %p54 = scmp.eq.s32.totalorder %s18, 1
      %p55 = por %p53, %p54
      %p57 = scmp.ne.s32.totalorder %s40, %s56
      %p58 = scmp.eq.s32.totalorder %s18, 0
      %p59 = por %p57, %p58
      %s60 = ssub.s32 %s19, %s31
      %p61 = scmp.eq.s32.totalorder %s60, 0
      %s63 = sadd.s32 %s62, 1
      %s64 = scalar_select %p61, %s62, %s63
      %p67 = pneg %p61
      %p68 = scmp.eq.s32.totalorder %s12, 1
      %p69 = por %p67, %p68
      %p70 = scmp.ne.s32.totalorder %s62, %s65
      %p71 = scmp.eq.s32.totalorder %s12, 0
      %p72 = por %p70, %p71
      %p73 = scmp.ne.s32.totalorder %s62, %s65
      %p74 = scmp.eq.s32.totalorder %s17, 1
      %p75 = por %p73, %p74
      %p76 = scmp.ne.s32.totalorder %s65, %s66
      %p77 = scmp.eq.s32.totalorder %s17, 0
      %p78 = por %p76, %p77
      %p79 = scmp.ne.s32.totalorder %s65, %s66
      %p80 = scmp.eq.s32.totalorder %s18, 1
      %p81 = por %p79, %p80
      %p83 = scmp.ne.s32.totalorder %s66, %s82
      %p84 = scmp.eq.s32.totalorder %s18, 0
      %p85 = por %p83, %p84
      %s86 = ssub.s32 %s20, %s27
      %s87 = ssub.s32 %s19, %s31
      %s88 = sor.u32 %s86, %s87
      %p89 = scmp.eq.s32.totalorder %s88, 0
      %s91 = sadd.s32 %s90, 1
      %s92 = scalar_select %p89, %s90, %s91
      %p95 = pneg %p89
      %p96 = scmp.eq.s32.totalorder %s12, 1
      %p97 = por %p95, %p96
      %p98 = scmp.ne.s32.totalorder %s90, %s93
      %p99 = scmp.eq.s32.totalorder %s12, 0
      %p100 = por %p98, %p99
      %p101 = scmp.ne.s32.totalorder %s90, %s93
      %p102 = scmp.eq.s32.totalorder %s17, 1
      %p103 = por %p101, %p102
      %p104 = scmp.ne.s32.totalorder %s93, %s94
      %p105 = scmp.eq.s32.totalorder %s17, 0
      %p106 = por %p104, %p105
      %p107 = scmp.ne.s32.totalorder %s93, %s94
      %p108 = scmp.eq.s32.totalorder %s18, 1
      %p109 = por %p107, %p108
      %p111 = scmp.ne.s32.totalorder %s94, %s110
      %p112 = scmp.eq.s32.totalorder %s18, 0
      %p113 = por %p111, %p112
      %p114 = scmp.le.s32.totalorder 1, %s12
      %p115 = scmp.lt.s32.totalorder %s12, 3
      %p116 = pnand %p114, %p115
      %p117 = pneg %p116
      // Predicated region
      $region9: #{tpu_custom_call.1} parent=5 // pred_check
        _
      $region10: #{tpu_custom_call.1} parent=5 // pred_check_branch
        %119 = sbr.rel (%p116) target = $region12
      $region11: #{tpu_custom_call.1} parent=5 // pred_region
        %s120 = ssub.s32 %s12, 1
        // Predicated region
        $region13: #{tpu_custom_call.1} parent=11 // pred_check
          %p121 = pneg %p78
        $region14: #{tpu_custom_call.1} parent=11 // pred_check_branch
          %123 = sbr.rel (%p121) target = $region16
        $region15: #{tpu_custom_call.1} parent=11 // pred_region
          %s124 = smul.u32 2, %s21
          %s126 = ssub.s32 256, 256
          %127 = vsyncadd [#allocation5], %s126
          %s128 = smul.addr %s124, 128
          %s129 = scalar_lea.hbm %s1, %s128
          %s131 = sshll.u32 [#allocation4], 4
          %s132 = int_to_ptr.vmem [resolvable:$true] %s131
          %134 = dma.hbm_to_vmem [thread:$0]  %s129, 256, %s132, [#allocation5]
        $region16: #{tpu_custom_call.1} parent=11 // pred_fallthru
          _
      $region12: #{tpu_custom_call.1} parent=5 // pred_fallthru
        _
      %p135 = scmp.lt.s32.totalorder %s12, 2
      // Predicated region
      $region17: #{tpu_custom_call.1} parent=5 // pred_check
        %p136 = pneg %p135
      $region18: #{tpu_custom_call.1} parent=5 // pred_check_branch
        %138 = sbr.rel (%p136) target = $region20
      $region19: #{tpu_custom_call.1} parent=5 // pred_region
        // Predicated region
        $region21: #{tpu_custom_call.1} parent=19 // pred_check
          %p139 = pneg %p46
        $region22: #{tpu_custom_call.1} parent=19 // pred_check_branch
          %141 = sbr.rel (%p139) target = $region24
        $region23: #{tpu_custom_call.1} parent=19 // pred_region
          %s142 = sand.u32 %s36, 1
          %s143 = scalar_lea.sflag [#allocation3], %s142
          %s144 = sand.u32 %s36, 1
          %s145 = smul.addr %s144, 8
          %s146 = scalar_lea.vmem [#allocation2], %s145
          %s147 = smul.u32 2, %s19
          %s149 = ssub.s32 128, 128
          %150 = vsyncadd %s143, %s149
          %s151 = smul.addr %s20, 2
          %s152 = sadd.s32 %s147, %s151
          %s153 = smul.addr %s152, 64
          %s154 = scalar_lea.hbm %s0, %s153
          %s156 = sshll.u32 %s146, 4
          %s157 = int_to_ptr.vmem [resolvable:$true] %s156
          %159 = dma.hbm_to_vmem [thread:$0]  %s154, 128, %s157, %s143
        $region24: #{tpu_custom_call.1} parent=19 // pred_fallthru
          _
      $region20: #{tpu_custom_call.1} parent=5 // pred_fallthru
        _
      %p160 = scmp.le.s32.totalorder 1, %s12
      %p161 = scmp.lt.s32.totalorder %s12, 3
      %p162 = pnand %p160, %p161
      %p163 = pneg %p162
      // Predicated region
      $region25: #{tpu_custom_call.1} parent=5 // pred_check
        _
      $region26: #{tpu_custom_call.1} parent=5 // pred_check_branch
        %165 = sbr.rel (%p162) target = $region28
      $region27: #{tpu_custom_call.1} parent=5 // pred_region
        %s166 = ssub.s32 %s12, 1
        %s167 = sand.u32 %s39, 1
        %s168 = scalar_lea.sflag [#allocation3], %s167
        %s169 = sand.u32 %s39, 1
        %s170 = smul.addr %s169, 8
        %s171 = scalar_lea.vmem [#allocation2], %s170
        // Predicated region
        $region29: #{tpu_custom_call.1} parent=27 // pred_check
          %p172 = pneg %p52
        $region30: #{tpu_custom_call.1} parent=27 // pred_check_branch
          %174 = sbr.rel (%p172) target = $region32
        $region31: #{tpu_custom_call.1} parent=27 // pred_region
          %175 = dma.done %s168, 128
        $region32: #{tpu_custom_call.1} parent=27 // pred_fallthru
          _
        // Predicated region
        $region33: #{tpu_custom_call.1} parent=27 // pred_check
          %p176 = pneg %p78
        $region34: #{tpu_custom_call.1} parent=27 // pred_check_branch
          %178 = sbr.rel (%p176) target = $region36
        $region35: #{tpu_custom_call.1} parent=27 // pred_region
          %179 = dma.done [#allocation5], 256
        $region36: #{tpu_custom_call.1} parent=27 // pred_fallthru
          _
        %s180 = sand.u32 %s39, 1
        %s181 = scalar_lea.sflag [#allocation3], %s180
        %s182 = sand.u32 %s39, 1
        %s183 = smul.addr %s182, 8
        %s184 = scalar_lea.vmem [#allocation2], %s183
        %p185 = pneg %p52
        %p186 = pneg %p49
        %p187 = pneg %p78
        %p188 = pneg %p75
        %p189 = pneg %p106
        %p190 = pneg %p103
        %s191 = smul.u32 2, %s21
        %p192 = scmp.lt.s32.totalorder %s22, 1
        %s193 = scalar_select %p192, %s22, 1
        %p194 = scmp.lt.s32.totalorder %s191, 1
        %s195 = scalar_select %p194, %s191, 1
        %s196 = smul.addr %s193, 4
        %s197 = sadd.s32 %s195, %s196
        %s198 = smul.addr %s197, 8
        %s199 = scalar_lea.vmem %s2, %s198
        %s200 = smul.u32 2, %s21
        %s201 = smul.u32 2, %s21
        %s202 = smul.u32 2, %s21
        %p203 = scmp.lt.s32.totalorder %s22, 1
        %s204 = scalar_select %p203, %s22, 1
        %p205 = scmp.lt.s32.totalorder %s202, 1
        %s206 = scalar_select %p205, %s202, 1
        %s207 = smul.addr %s204, 4
        %s208 = sadd.s32 %s206, %s207
        %s209 = smul.addr %s208, 8
        %s210 = scalar_lea.vmem %s2, %s209
        %s211 = smul.u32 2, %s21
        %v212 = vld [vmem:[%s171] sm:$0xff]
        %v213 = vld [vmem:[#allocation4] sm:$0xff]
        %v214 = vld [vmem:[#allocation4 + $0x8] sm:$0xff]
        %v216 = vcombine.high %v212, %v212
        %v220 = vrot.slane %v213, 4
        %v221 = vrot.slane %v214, 4
        %vm224 = vcmask 1043456
        %v225 = vsel %vm224, %v212, %v220
        %v226 = vsel %vm224, %v216, %v221
        %227 = vst [vmem:[%s210] sm:$0xff] %v225
        %228 = vst [vmem:[%s210 + $0x8] sm:$0xff] %v226
        %229 = vst [vmem:[%s210 + $0x10] sm:$0xf] %v220
        %230 = vst [vmem:[%s210 + $0x18] sm:$0xf] %v221
        %s231 = smul.u32 2, %s21
        %p232 = scmp.lt.s32.totalorder %s22, 1
        %s233 = scalar_select %p232, %s22, 1
        %p234 = scmp.lt.s32.totalorder %s231, 1
        %s235 = scalar_select %p234, %s231, 1
        %s236 = smul.addr %s233, 4
        %s237 = sadd.s32 %s235, %s236
        %s238 = smul.addr %s237, 8
        %s239 = scalar_lea.vmem %s2, %s238
        // Predicated region
        $region37: #{tpu_custom_call.1} parent=27 // pred_check
          %p240 = pneg %p103
        $region38: #{tpu_custom_call.1} parent=27 // pred_check_branch
          %242 = sbr.rel (%p240) target = $region40
        $region39: #{tpu_custom_call.1} parent=27 // pred_region
          %s243 = smul.u32 2, %s21
        $region40: #{tpu_custom_call.1} parent=27 // pred_fallthru
          _
      $region28: #{tpu_custom_call.1} parent=5 // pred_fallthru
        _
      %p244 = scmp.le.s32.totalorder 2, %s12
      // Predicated region
      $region41: #{tpu_custom_call.1} parent=5 // pred_check
        %p245 = pneg %p244
      $region42: #{tpu_custom_call.1} parent=5 // pred_check_branch
        %247 = sbr.rel (%p245) target = $region44
      $region43: #{tpu_custom_call.1} parent=5 // pred_region
        %s248 = ssub.s32 %s12, 2
        // Predicated region
        $region45: #{tpu_custom_call.1} parent=43 // pred_check
          %p249 = pneg %p109
        $region46: #{tpu_custom_call.1} parent=43 // pred_check_branch
          %251 = sbr.rel (%p249) target = $region48
        $region47: #{tpu_custom_call.1} parent=43 // pred_region
          %s252 = smul.u32 2, %s23
          %p253 = scmp.lt.s32.totalorder %s24, 1
          %s254 = scalar_select %p253, %s24, 1
          %p255 = scmp.lt.s32.totalorder %s252, 1
          %s256 = scalar_select %p255, %s252, 1
          %s257 = smul.addr %s254, 4
          %s258 = sadd.s32 %s256, %s257
          %s259 = smul.addr %s258, 8
          %s260 = scalar_lea.vmem %s2, %s259
        $region48: #{tpu_custom_call.1} parent=43 // pred_fallthru
          _
      $region44: #{tpu_custom_call.1} parent=5 // pred_fallthru
        _
    $region6: #{tpu_custom_call.1} parent=1 // loop_footer
      %s16 = sadd.s32 1, %s12
    $region7: #{tpu_custom_call.1} parent=1 // loop_footer_branch
      %11 = sbr.rel target = $region3
    $region8: #{tpu_custom_call.1} parent=1 // loop_exit
      _
    %261 = vsyncpa [#allocation3], 1
    %s262 = scalar_lea.sflag [#allocation3], 1
    %263 = vsyncpa %s262, 1
    %264 = vsyncpa [#allocation5], 1

</llo_original>
